<compile_context>
chip_gen: v7x
topology: tpu7x:2x2x1
jax: 0.10.0
libtpu: 0.0.40
codegen_flags: <defaults>
</compile_context>

<pallas_src>
import math

import jax
import jax.numpy as jnp
import numpy as np
from jax.experimental import pallas as pl
from jax.experimental.pallas import tpu as pltpu

# ---- Constants matching the PyTorch module --------------------------------------------------
_AMIN = 1e-10            # torchaudio AmplitudeToDB amin
_TOP_DB = 80.0
_CLAMP_MIN = -50.0
_CLAMP_MAX = 80.0
_SCALE_MIN = -79.6482
_SCALE_MAX = 50.6842

# dB = 10*log10(x) = _K * log2(x).  Work in log2 units in-kernel and fold _K into the affine /
# threshold constants: removes the per-element *10 multiply (VALU); log2 goes to the EUP slot.
_K = 10.0 / math.log2(10.0)
_TOP_DB2 = _TOP_DB / _K
_CLAMP_MIN2 = _CLAMP_MIN / _K
_CLAMP_MAX2 = _CLAMP_MAX / _K

# MinMax folded into one mul+add: out = db * _SCALE + _OFFSET = y_log2 * _SCALE2 + _OFFSET.
_SCALE = 2.0 / (_SCALE_MAX - _SCALE_MIN)
_OFFSET = -_SCALE_MIN * _SCALE - 1.0
_SCALE2 = _K * _SCALE

# ---- Tiling / VMEM budget --------------------------------------------------------------------
# Explicit accounting: 2x input + 2x output double buffers + ~2 blocks of compiler temps
# => total ~ 6x the input block.  A 2 MiB input block keeps that ~12 MiB, inside every
# generation's scoped-VMEM default (v5e 16 MiB, v6e/v7x 32 MiB); 32 MiB limit <= physical VMEM
# on every generation (v7x has 64 MiB physical).
_MAX_BLOCK_BYTES = 2 << 20
_VMEM_LIMIT_BYTES = 32 << 20
_MIN_GRID_STEPS = 8              # >= ~4 steps per v7x TensorCore to amortize ~0.35 us/step


# ---- Kernels ---------------------------------------------------------------------------------
def _atst_norm_fused_kernel(x_ref, o_ref):
    # Block is (b_tile, C*F, T): whole spectrogram(s) for b_tile batch elements.
    # Per-batch-element top_db cutoff from the RAW max (monotone => identical to max over dB),
    # with the lower clamp folded in.  First read of the pipelined input block.
    x_max = jnp.max(x_ref[...].astype(jnp.float32), axis=(1, 2), keepdims=True)
    cutoff = jnp.maximum(jnp.log2(jnp.maximum(x_max, _AMIN)) - _TOP_DB2, _CLAMP_MIN2)

    # Second read drives the fused elementwise pass (cast per-use so no whole-block VMEM temp is
    # materialized for non-f32 inputs; extra vld slots are not the bottleneck).
    y = jnp.log2(jnp.maximum(x_ref[...].astype(jnp.float32), _AMIN))     # EUP log2
    y = jnp.minimum(jnp.maximum(y, cutoff), _CLAMP_MAX2)                 # top_db floor + clamp
    o_ref[...] = (y * _SCALE2 + _OFFSET).astype(o_ref.dtype)             # MinMax affine


def _atst_norm_ew_kernel(cutoff_ref, x_ref, o_ref):
    # Purely elementwise pass; per-batch cutoff (log2 units, lower clamp pre-folded) lives in SMEM.
    c = cutoff_ref[pl.program_id(0)]
    y = jnp.log2(jnp.maximum(x_ref[...].astype(jnp.float32), _AMIN))
    y = jnp.minimum(jnp.maximum(y, c), _CLAMP_MAX2)
    o_ref[...] = (y * _SCALE2 + _OFFSET).astype(o_ref.dtype)


# ---- Tiling heuristics -----------------------------------------------------------------------
def _pick_b_tile(B, in_bytes_per_elem,
                 max_block_in_bytes=_MAX_BLOCK_BYTES, min_steps=_MIN_GRID_STEPS):
    """Batch tile for the fused path: block <= byte cap, enough (preferably even) grid steps."""
    bt = max(1, min(B, max_block_in_bytes // max(in_bytes_per_elem, 1)))
    if B >= min_steps:
        # Enough steps to amortize per-step overhead and keep both v7x cores streaming.
        bt = min(bt, max(1, B // min_steps))
    elif B >= 2:
        bt = min(bt, (B + 1) // 2)          # at least 2 steps so both v7x cores get work
    # Prefer an even step count (balanced megacore split); bt_even <= bt so the byte cap holds.
    steps = -(-B // bt)
    if steps > 1 and steps % 2 == 1:
        bt_even = max(1, -(-B // (steps + 1)))
        if (-(-B // bt_even)) % 2 == 0:
            bt = bt_even
    return bt


def _pick_r_tile(R, T, in_itemsize,
                 max_block_in_bytes=_MAX_BLOCK_BYTES, min_steps=1):
    """Row (C*F) tile for the two-pass path; multiple of 8 unless it spans the full extent."""
    rows = max(1, max_block_in_bytes // max(T * in_itemsize, 1))
    if min_steps > 1 and R >= 8 * min_steps:
        rows = min(rows, R // min_steps)
    rows = min(rows, R)
    if rows < R:
        rows = max(8, (rows // 8) * 8)      # (8, 128) tiling constraint on the sublane dim
    return rows


# ---- Wrappers --------------------------------------------------------------------------------
def _atst_norm_two_pass(x, out_dtype):
    """Fallback: per-batch cutoff precomputed (one extra read pass), elementwise kernel tiles R."""
    B, R, T = x.shape
    x_max = jnp.max(x.astype(jnp.float32), axis=(1, 2))
    cutoff = jnp.maximum(jnp.log2(jnp.maximum(x_max, _AMIN)) - _TOP_DB2, _CLAMP_MIN2)

    r_tile = _pick_r_tile(R, T, x.dtype.itemsize, min_steps=pl.cdiv(_MIN_GRID_STEPS, B))
    grid = (B, pl.cdiv(R, r_tile))
    return pl.pallas_call(
        _atst_norm_ew_kernel,
        out_shape=jax.ShapeDtypeStruct((B, R, T), out_dtype),
        grid_spec=pltpu.PrefetchScalarGridSpec(
            num_scalar_prefetch=1,
            grid=grid,
            in_specs=[pl.BlockSpec((1, r_tile, T), lambda b, r, c: (b, r, 0))],
            out_specs=pl.BlockSpec((1, r_tile, T), lambda b, r, c: (b, r, 0)),
        ),
        compiler_params=pltpu.CompilerParams(
            dimension_semantics=("parallel", "parallel"),
            vmem_limit_bytes=_VMEM_LIMIT_BYTES,
        ),
    )(cutoff, x)


def atst_norm(spec, out_dtype=None):
    """spec: (B, C, F, T) power spectrogram.  out_dtype=jnp.bfloat16 halves HBM write traffic."""
    B, C, F, T = spec.shape
    R = C * F
    out_dtype = spec.dtype if out_dtype is None else np.dtype(out_dtype)
    x = spec.reshape(B, R, T)                      # lane-dense slab; free contiguous reshape

    in_bytes_per_elem = R * T * x.dtype.itemsize
    if in_bytes_per_elem > _MAX_BLOCK_BYTES or (B == 1 and in_bytes_per_elem >= (1 << 20)):
        # One (C*F, T) element exceeds the block budget, or B == 1 on a large clip: two-pass path
        # restores multi-step pipelining / megacore parallelism at the cost of one extra read.
        out = _atst_norm_two_pass(x, out_dtype)
    else:
        b_tile = _pick_b_tile(B, in_bytes_per_elem)
        grid = (pl.cdiv(B, b_tile),)               # ragged last block: padded batch rows only;
        out = pl.pallas_call(                      # their max/outputs stay confined to those rows.
            _atst_norm_fused_kernel,
            out_shape=jax.ShapeDtypeStruct((B, R, T), out_dtype),
            grid_spec=pltpu.PrefetchScalarGridSpec(
                num_scalar_prefetch=0,
                grid=grid,
                in_specs=[pl.BlockSpec((b_tile, R, T), lambda b: (b, 0, 0))],
                out_specs=pl.BlockSpec((b_tile, R, T), lambda b: (b, 0, 0)),
            ),
            compiler_params=pltpu.CompilerParams(
                dimension_semantics=("parallel",),
                vmem_limit_bytes=_VMEM_LIMIT_BYTES,
            ),
        )(x)
    return out.reshape(B, C, F, T)


# ---- Pure-JAX reference (matches the PyTorch module) -----------------------------------------
def _atst_norm_ref(spec):
    x = spec.astype(jnp.float32)
    db = 10.0 * jnp.log10(jnp.maximum(x, _AMIN))
    cutoff = jnp.max(db, axis=(1, 2, 3), keepdims=True) - _TOP_DB
    db = jnp.maximum(db, cutoff)
    db = jnp.clip(db, _CLAMP_MIN, _CLAMP_MAX)
    return (db - _SCALE_MIN) / (_SCALE_MAX - _SCALE_MIN) * 2.0 - 1.0


if __name__ == "__main__":
    key = jax.random.PRNGKey(0)

    # 1) Fused single-pass path, even batch.
    B, C, F, T = 2, 4, 16, 128
    mag = jax.random.normal(key, (B, C, F, T), dtype=jnp.float32)
    spec = (mag * mag) * 10.0 + 1e-6                 # power spectrogram: non-negative, wide range
    out = jax.block_until_ready(atst_norm(spec))
    ref = _atst_norm_ref(spec)
    assert out.shape == spec.shape and out.dtype == spec.dtype
    assert jnp.allclose(out, ref, atol=1e-5, rtol=1e-5), "mismatch vs JAX reference (fused path)"

    # 2) Fused path with a non-dividing (cdiv) grid: odd batch -> ragged last block.
    k1 = jax.random.fold_in(key, 1)
    mag3 = jax.random.normal(k1, (3, 4, 16, 128), dtype=jnp.float32)
    spec3 = (mag3 * mag3) * 5.0 + 1e-6
    out3 = jax.block_until_ready(atst_norm(spec3))
    assert jnp.allclose(out3, _atst_norm_ref(spec3), atol=1e-5, rtol=1e-5), \
        "mismatch vs JAX reference (ragged-grid path)"

    # 3) Two-pass fallback path (B=1, >= 1 MiB element -> scalar-prefetch cutoff + R tiling).
    k2 = jax.random.fold_in(key, 2)
    mag1 = jax.random.normal(k2, (1, 4, 64, 1024), dtype=jnp.float32)
    spec1 = (mag1 * mag1) * 2.0 + 1e-6
    out1 = jax.block_until_ready(atst_norm(spec1))
    assert jnp.allclose(out1, _atst_norm_ref(spec1), atol=1e-5, rtol=1e-5), \
        "mismatch vs JAX reference (two-pass path)"

    # 4) Optional bf16 output (bandwidth saver); coarse tolerance, result is in [-1, 1].
    out_bf16 = jax.block_until_ready(atst_norm(spec, out_dtype=jnp.bfloat16))
    assert out_bf16.dtype == jnp.bfloat16
    assert jnp.allclose(out_bf16.astype(jnp.float32), ref, atol=2e-2), "bf16 output mismatch"

    print("KERNEL_OK")
</pallas_src>

<mosaic_0001>
module attributes {stable_mosaic.version = 11 : i64} {
  func.func @_atst_norm_fused_kernel(%arg0: i32, %arg1: memref<1x64x128xf32, #tpu.memory_space<vmem>>, %arg2: memref<1x64x128xf32, #tpu.memory_space<vmem>>) attributes {dimension_semantics = [#tpu.dimension_semantics<parallel>], iteration_bounds = array<i64: 2>, scalar_prefetch = 0 : i64, scratch_operands = 0 : i64, tpu.core_type = #tpu.core_type<tc>, window_params = [{transform_indices = @transform_0, window_bounds = array<i64: 1, 64, 128>}, {transform_indices = @transform_1, window_bounds = array<i64: 1, 64, 128>}]} {
    %c0 = arith.constant 0 : index
    %c0_0 = arith.constant 0 : index
    %c0_1 = arith.constant 0 : index
    %0 = vector.load %arg1[%c0, %c0_0, %c0_1] : memref<1x64x128xf32, #tpu.memory_space<vmem>>, vector<1x64x128xf32>
    %cst = arith.constant dense<0xFF800000> : vector<1xf32>
    %1 = vector.multi_reduction <maximumf>, %0, %cst [1, 2] : vector<1x64x128xf32> to vector<1xf32>
    %2 = vector.shape_cast %1 : vector<1xf32> to vector<1x1x1xf32>
    %cst_2 = arith.constant 1.000000e-10 : f32
    %3 = vector.broadcast %cst_2 : f32 to vector<1x1x1xf32>
    %4 = arith.maximumf %2, %3 : vector<1x1x1xf32>
    %5 = math.log %4 : vector<1x1x1xf32>
    %cst_3 = arith.constant 2.000000e+00 : f32
    %6 = math.log %cst_3 : f32
    %7 = vector.broadcast %6 : f32 to vector<1x1x1xf32>
    %8 = arith.divf %5, %7 : vector<1x1x1xf32>
    %cst_4 = arith.constant 26.5754242 : f32
    %9 = vector.broadcast %cst_4 : f32 to vector<1x1x1xf32>
    %10 = arith.subf %8, %9 : vector<1x1x1xf32>
    %cst_5 = arith.constant -16.6096401 : f32
    %11 = vector.broadcast %cst_5 : f32 to vector<1x1x1xf32>
    %12 = arith.maximumf %10, %11 : vector<1x1x1xf32>
    %c0_6 = arith.constant 0 : index
    %c0_7 = arith.constant 0 : index
    %c0_8 = arith.constant 0 : index
    %13 = vector.load %arg1[%c0_6, %c0_7, %c0_8] : memref<1x64x128xf32, #tpu.memory_space<vmem>>, vector<1x64x128xf32>
    %cst_9 = arith.constant 1.000000e-10 : f32
    %14 = vector.broadcast %cst_9 : f32 to vector<1x64x128xf32>
    %15 = arith.maximumf %13, %14 : vector<1x64x128xf32>
    %16 = math.log %15 : vector<1x64x128xf32>
    %cst_10 = arith.constant 2.000000e+00 : f32
    %17 = math.log %cst_10 : f32
    %18 = vector.broadcast %17 : f32 to vector<1x64x128xf32>
    %19 = arith.divf %16, %18 : vector<1x64x128xf32>
    %20 = vector.broadcast %12 : vector<1x1x1xf32> to vector<1x64x128xf32>
    %21 = arith.maximumf %19, %20 : vector<1x64x128xf32>
    %cst_11 = arith.constant 26.5754242 : f32
    %22 = vector.broadcast %cst_11 : f32 to vector<1x64x128xf32>
    %23 = arith.minimumf %21, %22 : vector<1x64x128xf32>
    %cst_12 = arith.constant 0.046194192 : f32
    %24 = vector.broadcast %cst_12 : f32 to vector<1x64x128xf32>
    %25 = arith.mulf %23, %24 : vector<1x64x128xf32>
    %cst_13 = arith.constant 0.222231776 : f32
    %26 = vector.broadcast %cst_13 : f32 to vector<1x64x128xf32>
    %27 = arith.addf %25, %26 : vector<1x64x128xf32>
    %c0_14 = arith.constant 0 : index
    %c0_15 = arith.constant 0 : index
    %c0_16 = arith.constant 0 : index
    %28 = vector.load %arg2[%c0_14, %c0_15, %c0_16] : memref<1x64x128xf32, #tpu.memory_space<vmem>>, vector<1x64x128xf32>
    tpu.vector_store %arg2[%c0_14, %c0_15, %c0_16], %27 {strides = array<i32>} : memref<1x64x128xf32, #tpu.memory_space<vmem>>, vector<1x64x128xf32>,
    return
  }
  func.func @transform_0(%arg0: i32) -> (i32, i32, i32) {
    %c0_i32 = arith.constant 0 : i32
    %c0_i32_0 = arith.constant 0 : i32
    %c0_i32_1 = arith.constant 0 : i32
    return %arg0, %c0_i32, %c0_i32_0 : i32, i32, i32
  }
  func.func @transform_1(%arg0: i32) -> (i32, i32, i32) {
    %c0_i32 = arith.constant 0 : i32
    %c0_i32_0 = arith.constant 0 : i32
    %c0_i32_1 = arith.constant 0 : i32
    return %arg0, %c0_i32, %c0_i32_0 : i32, i32, i32
  }
}

</mosaic_0001>

<llo_original>
// kernel: tpu_custom_call.1
$region0: #{tpu_custom_call.1}
  #allocation0 [shape = 'u32[]', space=smem, size = 0x4, offset = 0x4, fixed_abs, tag = 'smem constant byte address 0x4 - core index']
  #allocation1 [shape = 'u32[144,128]{1,0:T(1,128)}', space=vmem, size = 0x12000, scoped, tag = 'internal scratch']
  %s0 = inlined_call_operand.hbm [shape: f32[2,64,128], index: 0, kind: input, shape index: {}]
  %s1 = inlined_call_operand.hbm [shape: f32[2,64,128], index: 1, kind: output, shape index: {}]
  %s2 = sld [smem:[#allocation0]]
  $region41: #{tpu_custom_call.1} parent=0
    _
  %s4 = ssub.s32 1, %s2
  %s5 = scalar_select 0, %s4, %s2
  $region1: #{tpu_custom_call.1} parent=0
    #allocation2 [shape = 'u8[65536]{0}', space=vmem, size = 0x10000, scoped, tag = 'input window, operand 0']
    #allocation3 [shape = 's32[2]{0}', space=sflag, size = 0x8, scoped, tag = 'scoped memory for tpu_custom_call.1']
    #allocation4 [shape = 's32[2]{0}', space=sflag, size = 0x8, scoped, tag = 'scoped memory for tpu_custom_call.1']
    #allocation5 [shape = 'u8[65536]{0}', space=vmem, size = 0x10000, scoped, tag = 'output window, operand 0']
    %6 = vsyncpa [#allocation3], 0
    %s7 = scalar_lea.sflag [#allocation3], 1
    %8 = vsyncpa %s7, 0
    %9 = vsyncpa [#allocation4], 0
    %s10 = scalar_lea.sflag [#allocation4], 1
    %11 = vsyncpa %s10, 0
    loop: start=0, step=1, limit=4
    $region2: #{tpu_custom_call.1} parent=1 // loop_pre_header
      _
    $region3: #{tpu_custom_call.1} parent=1 // loop_header
      %s13 = sphi 0, %s17
      %p14 = scmp.ge.s32.totalorder %s13, 4
      %s23 = sphi 0, %s25
      %s26 = sphi 0, %s23
      %s27 = sphi 0, %s26
      %s43 = sphi 0, %s27
      %s49 = sphi 0, %s51
      %s52 = sphi 0, %s49
      %s53 = sphi 0, %s52
      %s69 = sphi 0, %s53
    $region4: #{tpu_custom_call.1} parent=1 // loop_header_branch
      %16 = sbr.rel (%p14) target = $region8
    $region5: #{tpu_custom_call.1} parent=1 // loop_body
      %s18 = ssub.s32 %s13, 1
      %s19 = ssub.s32 %s13, 2
      %s20 = sadd.s32 %s13, 1
      %s21 = ssub.s32 %s13, %s20
      %p22 = scmp.eq.s32.totalorder %s21, 0
      %s24 = sadd.s32 %s23, 1
      %s25 = scalar_select %p22, %s23, %s24
      %p28 = pneg %p22
      %p29 = scmp.eq.s32.totalorder %s13, 1
      %p30 = por %p28, %p29
      %p31 = scmp.ne.s32.totalorder %s23, %s26
      %p32 = scmp.eq.s32.totalorder %s13, 0
      %p33 = por %p31, %p32
      %p34 = scmp.ne.s32.totalorder %s23, %s26
      %p35 = scmp.eq.s32.totalorder %s18, 1
      %p36 = por %p34, %p35
      %p37 = scmp.ne.s32.totalorder %s26, %s27
      %p38 = scmp.eq.s32.totalorder %s18, 0
      %p39 = por %p37, %p38
      %p40 = scmp.ne.s32.totalorder %s26, %s27
      %p41 = scmp.eq.s32.totalorder %s19, 1
      %p42 = por %p40, %p41
      %p44 = scmp.ne.s32.totalorder %s27, %s43
      %p45 = scmp.eq.s32.totalorder %s19, 0
      %p46 = por %p44, %p45
      %s47 = ssub.s32 %s13, %s20
      %p48 = scmp.eq.s32.totalorder %s47, 0
      %s50 = sadd.s32 %s49, 1
      %s51 = scalar_select %p48, %s49, %s50
      %p54 = pneg %p48
      %p55 = scmp.eq.s32.totalorder %s13, 1
      %p56 = por %p54, %p55
      %p57 = scmp.ne.s32.totalorder %s49, %s52
      %p58 = scmp.eq.s32.totalorder %s13, 0
      %p59 = por %p57, %p58
      %p60 = scmp.ne.s32.totalorder %s49, %s52
      %p61 = scmp.eq.s32.totalorder %s18, 1
      %p62 = por %p60, %p61
      %p63 = scmp.ne.s32.totalorder %s52, %s53
      %p64 = scmp.eq.s32.totalorder %s18, 0
      %p65 = por %p63, %p64
      %p66 = scmp.ne.s32.totalorder %s52, %s53
      %p67 = scmp.eq.s32.totalorder %s19, 1
      %p68 = por %p66, %p67
      %p70 = scmp.ne.s32.totalorder %s53, %s69
      %p71 = scmp.eq.s32.totalorder %s19, 0
      %p72 = por %p70, %p71
      %p73 = scmp.le.s32.totalorder 1, %s13
      %p74 = scmp.lt.s32.totalorder %s13, 3
      %p75 = pnand %p73, %p74
      %p76 = pneg %p75
      // Predicated region
      $region9: #{tpu_custom_call.1} parent=5 // pred_check
        _
      $region10: #{tpu_custom_call.1} parent=5 // pred_check_branch
        %78 = sbr.rel (%p75) target = $region12
      $region11: #{tpu_custom_call.1} parent=5 // pred_region
        %s79 = ssub.s32 %s13, 1
      $region12: #{tpu_custom_call.1} parent=5 // pred_fallthru
        _
      %p80 = scmp.lt.s32.totalorder %s13, 2
      // Predicated region
      $region13: #{tpu_custom_call.1} parent=5 // pred_check
        %p81 = pneg %p80
      $region14: #{tpu_custom_call.1} parent=5 // pred_check_branch
        %83 = sbr.rel (%p81) target = $region16
      $region15: #{tpu_custom_call.1} parent=5 // pred_region
        // Predicated region
        $region17: #{tpu_custom_call.1} parent=15 // pred_check
          %p84 = pneg %p33
        $region18: #{tpu_custom_call.1} parent=15 // pred_check_branch
          %86 = sbr.rel (%p84) target = $region20
        $region19: #{tpu_custom_call.1} parent=15 // pred_region
          %s87 = sand.u32 %s23, 1
          %s88 = scalar_lea.sflag [#allocation3], %s87
          %s89 = sand.u32 %s23, 1
          %s90 = smul.addr %s89, 64
          %s91 = scalar_lea.vmem [#allocation2], %s90
          %s93 = ssub.s32 1024, 1024
          %94 = vsyncadd %s88, %s93
          %s95 = smul.addr %s13, 8
          %s96 = smul.addr %s95, 128
          %s97 = scalar_lea.hbm %s0, %s96
          %s98 = sshll.u32 %s91, 4
          %s99 = int_to_ptr.vmem [resolvable:$true] %s98
          %104 = dma.hbm_to_vmem [thread:$0]  %s97, 1024, %s99, %s88, 128, 128, 8
        $region20: #{tpu_custom_call.1} parent=15 // pred_fallthru
          _
      $region16: #{tpu_custom_call.1} parent=5 // pred_fallthru
        _
      %p105 = scmp.le.s32.totalorder 1, %s13
      %p106 = scmp.lt.s32.totalorder %s13, 3
      %p107 = pnand %p105, %p106
      %p108 = pneg %p107
      // Predicated region
      $region21: #{tpu_custom_call.1} parent=5 // pred_check
        _
      $region22: #{tpu_custom_call.1} parent=5 // pred_check_branch
        %110 = sbr.rel (%p107) target = $region24
      $region23: #{tpu_custom_call.1} parent=5 // pred_region
        %s111 = ssub.s32 %s13, 1
        %s112 = sand.u32 %s26, 1
        %s113 = scalar_lea.sflag [#allocation3], %s112
        %s114 = sand.u32 %s26, 1
        %s115 = smul.addr %s114, 64
        %s116 = scalar_lea.vmem [#allocation2], %s115
        // Predicated region
        $region25: #{tpu_custom_call.1} parent=23 // pred_check
          %p117 = pneg %p39
        $region26: #{tpu_custom_call.1} parent=23 // pred_check_branch
          %119 = sbr.rel (%p117) target = $region28
        $region27: #{tpu_custom_call.1} parent=23 // pred_region
          %120 = dma.done %s113, 1024
        $region28: #{tpu_custom_call.1} parent=23 // pred_fallthru
          _
        %s121 = sand.u32 %s26, 1
        %s122 = scalar_lea.sflag [#allocation3], %s121
        %s123 = sand.u32 %s26, 1
        %s124 = smul.addr %s123, 64
        %s125 = scalar_lea.vmem [#allocation2], %s124
        %p126 = pneg %p39
        %p127 = pneg %p36
        %p128 = pneg %p65
        %p129 = pneg %p62
        %s130 = sand.u32 %s52, 1
        %s131 = scalar_lea.sflag [#allocation4], %s130
        %s132 = sand.u32 %s52, 1
        %s133 = smul.addr %s132, 64
        %s134 = scalar_lea.vmem [#allocation5], %s133
        %v135 = vld [vmem:[%s116] sm:$0xff]
        %v136 = vld [vmem:[%s116 + $0x8] sm:$0xff]
        %v137 = vld [vmem:[%s116 + $0x10] sm:$0xff]
        %v138 = vld [vmem:[%s116 + $0x18] sm:$0xff]
        %v139 = vld [vmem:[%s116 + $0x20] sm:$0xff]
        %v140 = vld [vmem:[%s116 + $0x28] sm:$0xff]
        %v141 = vld [vmem:[%s116 + $0x30] sm:$0xff]
        %v142 = vld [vmem:[%s116 + $0x38] sm:$0xff]
        %v143 = vmax.f32 %v135, %v139
        %v144 = vmax.f32 %v136, %v140
        %v145 = vmax.f32 %v137, %v141
        %v146 = vmax.f32 %v138, %v142
        %v147 = vmax.f32 %v143, %v144
        %v148 = vmax.f32 %v145, %v146
        %v149 = vmax.f32 %v147, %v148
        %150 = vmax.xlane.f32.xlu0 %v149
        %v151 = vpop.xlane.xlu0 %150
        %v152 = vrot.slane %v151, 4
        %v153 = vmax.f32 %v151, %v152
        %v154 = vrot.slane %v153, 2
        %v155 = vmax.f32 %v153, %v154
        %v156 = vrot.slane %v155, 1
        %v157 = vmax.f32 %v155, %v156
        %v158 = vmax.f32 %v157, 1e-10
        %v159 = vlog2.pop %v158
        %v160 = vmul.f32 %v159, 0.6931472
        %v161 = vrcp.pop 0.6931472
        %v162 = vmul.f32 %v160, %v161
        %v163 = vsub.f32 %v162, 26.575424
        %v164 = vmax.f32 %v163, -16.60964
        %v165 = vmax.f32 %v135, 1e-10
        %v166 = vmax.f32 %v136, 1e-10
        %v167 = vmax.f32 %v137, 1e-10
        %v168 = vmax.f32 %v138, 1e-10
        %v169 = vmax.f32 %v139, 1e-10
        %v170 = vmax.f32 %v140, 1e-10
        %v171 = vmax.f32 %v141, 1e-10
        %v172 = vmax.f32 %v142, 1e-10
        %v173 = vlog2.pop %v165
        %v174 = vmul.f32 %v173, 0.6931472
        %v175 = vlog2.pop %v166
        %v176 = vmul.f32 %v175, 0.6931472
        %v177 = vlog2.pop %v167
        %v178 = vmul.f32 %v177, 0.6931472
        %v179 = vlog2.pop %v168
        %v180 = vmul.f32 %v179, 0.6931472
        %v181 = vlog2.pop %v169
        %v182 = vmul.f32 %v181, 0.6931472
        %v183 = vlog2.pop %v170
        %v184 = vmul.f32 %v183, 0.6931472
        %v185 = vlog2.pop %v171
        %v186 = vmul.f32 %v185, 0.6931472
        %v187 = vlog2.pop %v172
        %v188 = vmul.f32 %v187, 0.6931472
        %v189 = vmul.f32 %v174, %v161
        %v190 = vmul.f32 %v176, %v161
        %v191 = vmul.f32 %v178, %v161
        %v192 = vmul.f32 %v180, %v161
        %v193 = vmul.f32 %v182, %v161
        %v194 = vmul.f32 %v184, %v161
        %v195 = vmul.f32 %v186, %v161
        %v196 = vmul.f32 %v188, %v161
        %v197 = vmax.f32 %v189, %v164
        %v198 = vmax.f32 %v190, %v164
        %v199 = vmax.f32 %v191, %v164
        %v200 = vmax.f32 %v192, %v164
        %v201 = vmax.f32 %v193, %v164
        %v202 = vmax.f32 %v194, %v164
        %v203 = vmax.f32 %v195, %v164
        %v204 = vmax.f32 %v196, %v164
        %v205 = vmin.f32 %v197, 26.575424
        %v206 = vmin.f32 %v198, 26.575424
        %v207 = vmin.f32 %v199, 26.575424
        %v208 = vmin.f32 %v200, 26.575424
        %v209 = vmin.f32 %v201, 26.575424
        %v210 = vmin.f32 %v202, 26.575424
        %v211 = vmin.f32 %v203, 26.575424
        %v212 = vmin.f32 %v204, 26.575424
        %v213 = vmul.f32 %v205, 0.046194192
        %v214 = vmul.f32 %v206, 0.046194192
        %v215 = vmul.f32 %v207, 0.046194192
        %v216 = vmul.f32 %v208, 0.046194192
        %v217 = vmul.f32 %v209, 0.046194192
        %v218 = vmul.f32 %v210, 0.046194192
        %v219 = vmul.f32 %v211, 0.046194192
        %v220 = vmul.f32 %v212, 0.046194192
        %v221 = vadd.f32 %v213, 0.22223178
        %v222 = vadd.f32 %v214, 0.22223178
        %v223 = vadd.f32 %v215, 0.22223178
        %v224 = vadd.f32 %v216, 0.22223178
        %v225 = vadd.f32 %v217, 0.22223178
        %v226 = vadd.f32 %v218, 0.22223178
        %v227 = vadd.f32 %v219, 0.22223178
        %v228 = vadd.f32 %v220, 0.22223178
        %229 = vst [vmem:[%s134] sm:$0xff] %v221
        %230 = vst [vmem:[%s134 + $0x8] sm:$0xff] %v222
        %231 = vst [vmem:[%s134 + $0x10] sm:$0xff] %v223
        %232 = vst [vmem:[%s134 + $0x18] sm:$0xff] %v224
        %233 = vst [vmem:[%s134 + $0x20] sm:$0xff] %v225
        %234 = vst [vmem:[%s134 + $0x28] sm:$0xff] %v226
        %235 = vst [vmem:[%s134 + $0x30] sm:$0xff] %v227
        %236 = vst [vmem:[%s134 + $0x38] sm:$0xff] %v228
        %s237 = sand.u32 %s52, 1
        %s238 = scalar_lea.sflag [#allocation4], %s237
        %s239 = sand.u32 %s52, 1
        %s240 = smul.addr %s239, 64
        %s241 = scalar_lea.vmem [#allocation5], %s240
        // Predicated region
        $region29: #{tpu_custom_call.1} parent=23 // pred_check
          %p242 = pneg %p62
        $region30: #{tpu_custom_call.1} parent=23 // pred_check_branch
          %244 = sbr.rel (%p242) target = $region32
        $region31: #{tpu_custom_call.1} parent=23 // pred_region
          %s246 = ssub.s32 1024, 1024
          %247 = vsyncadd %s238, %s246
          %s248 = smul.addr %s18, 8
          %s249 = smul.addr %s248, 128
          %s250 = scalar_lea.hbm %s1, %s249
          %s251 = sshll.u32 %s241, 4
          %s252 = int_to_ptr.vmem [resolvable:$true] %s251
          %257 = dma.vmem_to_hbm [thread:$0]  %s252, 1024, %s250, %s238, 128, 128, 8
        $region32: #{tpu_custom_call.1} parent=23 // pred_fallthru
          _
      $region24: #{tpu_custom_call.1} parent=5 // pred_fallthru
        _
      %p258 = scmp.le.s32.totalorder 2, %s13
      // Predicated region
      $region33: #{tpu_custom_call.1} parent=5 // pred_check
        %p259 = pneg %p258
      $region34: #{tpu_custom_call.1} parent=5 // pred_check_branch
        %261 = sbr.rel (%p259) target = $region36
      $region35: #{tpu_custom_call.1} parent=5 // pred_region
        %s262 = ssub.s32 %s13, 2
        // Predicated region
        $region37: #{tpu_custom_call.1} parent=35 // pred_check
          %p263 = pneg %p68
        $region38: #{tpu_custom_call.1} parent=35 // pred_check_branch
          %265 = sbr.rel (%p263) target = $region40
        $region39: #{tpu_custom_call.1} parent=35 // pred_region
          %s266 = sand.u32 %s53, 1
          %s267 = scalar_lea.sflag [#allocation4], %s266
          %s268 = sand.u32 %s53, 1
          %s269 = smul.addr %s268, 64
          %s270 = scalar_lea.vmem [#allocation5], %s269
          %271 = dma.done %s267, 1024
        $region40: #{tpu_custom_call.1} parent=35 // pred_fallthru
          _
      $region36: #{tpu_custom_call.1} parent=5 // pred_fallthru
        _
    $region6: #{tpu_custom_call.1} parent=1 // loop_footer
      %s17 = sadd.s32 1, %s13
    $region7: #{tpu_custom_call.1} parent=1 // loop_footer_branch
      %12 = sbr.rel target = $region3
    $region8: #{tpu_custom_call.1} parent=1 // loop_exit
      _
    %272 = vsyncpa [#allocation3], 1
    %s273 = scalar_lea.sflag [#allocation3], 1
    %274 = vsyncpa %s273, 1
    %275 = vsyncpa [#allocation4], 1
    %s276 = scalar_lea.sflag [#allocation4], 1
    %277 = vsyncpa %s276, 1

</llo_original>
